<compile_context>
chip_gen: v7x
topology: tpu7x:2x2x1
jax: 0.10.0
libtpu: 0.0.40
codegen_flags: <defaults>
</compile_context>

<pallas_src>
import jax
import jax.numpy as jnp
from jax.experimental import pallas as pl
from jax.experimental.pallas import tpu as pltpu

# ---------------- model config (small, consistent with the module) -----------
EMBED_DIM    = 32
NUM_FILTERS  = 16
FILTER_SIZES = (3, 4, 5)
NUM_CLASSES  = 8
BATCH        = 2
SEQ_LEN      = 16

_NB         = len(FILTER_SIZES)          # number of conv branches
_NBF        = _NB * NUM_FILTERS          # fc input features (48)
_TAPS       = sum(FILTER_SIZES)          # total conv taps (12)
_SMALL_ROWS = 8 + _NBF                   # fc_w starts at a sublane-tile boundary (row 8)


# ---------------- Pallas kernel: fused conv -> relu -> max-pool -> fc --------
def cnn_classifier_kernel(x_ref, wall_ref, small_ref, out_ref):
    """x_ref: (B*S, E) f32 | wall_ref: (E, taps*F) bf16 | small_ref: (56, 48) f32."""
    BS, _ = x_ref.shape
    B, C = out_ref.shape
    S = BS // B
    F = NUM_FILTERS

    # --- one fused conv matmul: every tap of every filter size, batch in M ---------
    # bf16 MXU operands / f32 accumulate; a single lane-dense (32,32)x(32,192) call.
    y = jnp.dot(x_ref[...].astype(jnp.bfloat16), wall_ref[...],
                preferred_element_type=jnp.float32)              # (B*S, taps*F) f32
    # major-dim split (16 % 8 == 0 -> tile-aligned, no relayout)
    y3 = y.reshape(B, S, y.shape[-1])                            # (B, S, taps*F)

    # --- unpack merged small-parameter tile (static slices) ------------------------
    cb_all = small_ref[0:1, :]                                   # (1, 48) conv biases
    fc_b   = small_ref[1:2, 0:C]                                 # (1, C)
    fc_w   = small_ref[8:8 + _NBF, 0:C]                          # (48, C)

    # --- per-branch tap combine (VPU adds on time-shifted lane slices) -------------
    # TODO(synk): these shifted slices could be traded for pltpu.roll + a binary
    # combiner matmul, but at S=16/B=2 the kernel is DMA/launch bound, so skipped.
    pooled_parts = []
    tap = 0
    for fs in FILTER_SIZES:
        L = S - fs + 1                                           # "valid" conv length
        acc = y3[:, 0:L, tap * F:(tap + 1) * F]
        for i in range(1, fs):
            acc = acc + y3[:, i:i + L, (tap + i) * F:(tap + i + 1) * F]
        tap += fs
        pooled_parts.append(jnp.max(acc, axis=1))                # (B, F) max over time

    # --- deferred bias + ReLU (exact), single FC matmul ------------------------------
    pooled = jnp.concatenate(pooled_parts, axis=-1)              # (B, 48)
    feat = jnp.maximum(pooled + cb_all, 0.0)
    # TODO(synk): nn.Dropout is identity at inference; no PRNG mask applied here.
    logits = jnp.dot(feat.astype(jnp.bfloat16), fc_w.astype(jnp.bfloat16),
                     preferred_element_type=jnp.float32)         # (B, C)
    out_ref[...] = (logits + fc_b).astype(out_ref.dtype)


# ---------------- one-time packing (hoisted out of the forward path) ---------
def pack_params(params):
    """9 tensors -> 2 kernel operands: w_all (bf16) and one merged small f32 tile."""
    # all conv tap weights stacked along the output (lane) dim: (E, sum(fs)*F), bf16
    w_all = jnp.concatenate(
        [params[f'w{idx}'][i]
         for idx, fs in enumerate(FILTER_SIZES) for i in range(fs)],
        axis=1).astype(jnp.bfloat16)
    # merged small tile: row 0 = conv biases (48), row 1 = fc bias (C),
    # rows 8:56 = fc weight (48, C); rows 2..7 are alignment padding.
    conv_b = jnp.concatenate([params[f'b{idx}'] for idx in range(_NB)], axis=1)  # (1,48)
    small = jnp.zeros((_SMALL_ROWS, _NBF), jnp.float32)
    small = small.at[0:1, :].set(conv_b)
    small = small.at[1:2, 0:NUM_CLASSES].set(params['fc_b'])
    small = small.at[8:8 + _NBF, 0:NUM_CLASSES].set(params['fc_w'])
    return w_all, small


# ---------------- wrapper: single grid-less pallas_call ----------------------
def cnn_classifier_forward(x, w_all, small):
    B, S, E = x.shape
    x_flat = x.reshape(B * S, E)        # free reshape outside the kernel (batch -> MXU M)
    vmem = pl.BlockSpec(memory_space=pltpu.MemorySpace.VMEM)
    return pl.pallas_call(
        cnn_classifier_kernel,
        out_shape=jax.ShapeDtypeStruct((B, NUM_CLASSES), jnp.float32),
        in_specs=[vmem, vmem, vmem],
        out_specs=vmem,
    )(x_flat, w_all, small)


# ---------------- deterministic parameter construction -----------------------
def init_params(key):
    params = {}
    keys = jax.random.split(key, 2 * _NB + 2)
    for idx, fs in enumerate(FILTER_SIZES):
        fan_in = 1 * fs * EMBED_DIM
        bound = 1.0 / jnp.sqrt(fan_in)
        # PyTorch conv weight is (F, 1, fs, E); stored here as (fs, E, F)
        params[f'w{idx}'] = jax.random.uniform(
            keys[2 * idx], (fs, EMBED_DIM, NUM_FILTERS),
            minval=-bound, maxval=bound, dtype=jnp.float32)
        params[f'b{idx}'] = jax.random.uniform(
            keys[2 * idx + 1], (1, NUM_FILTERS),
            minval=-bound, maxval=bound, dtype=jnp.float32)
    fan_in_fc = NUM_FILTERS * _NB
    bound = 1.0 / jnp.sqrt(fan_in_fc)
    # PyTorch Linear weight is (num_classes, in); stored transposed (in, num_classes)
    params['fc_w'] = jax.random.uniform(
        keys[-2], (fan_in_fc, NUM_CLASSES),
        minval=-bound, maxval=bound, dtype=jnp.float32)
    params['fc_b'] = jax.random.uniform(
        keys[-1], (1, NUM_CLASSES),
        minval=-bound, maxval=bound, dtype=jnp.float32)
    return params


# ---------------- pure-JAX reference for correctness --------------------------
def ref_forward(x, params, mxu_dtype=jnp.float32):
    """Module-semantics forward; mxu_dtype lets us match the kernel's bf16 MXU inputs."""
    pooled = []
    for idx, fs in enumerate(FILTER_SIZES):
        w = params[f'w{idx}']                                   # (fs, E, F)
        b = params[f'b{idx}']                                    # (1, F)
        L = x.shape[1] - fs + 1
        acc = None
        for i in range(fs):
            t = jnp.einsum('ble,ef->blf',
                           x[:, i:i + L, :].astype(mxu_dtype),
                           w[i].astype(mxu_dtype),
                           preferred_element_type=jnp.float32)
            acc = t if acc is None else acc + t
        acc = jax.nn.relu(acc + b[:, None, :])
        pooled.append(jnp.max(acc, axis=1))
    feat = jnp.concatenate(pooled, axis=1)
    logits = jnp.dot(feat.astype(mxu_dtype), params['fc_w'].astype(mxu_dtype),
                     preferred_element_type=jnp.float32)
    return logits + params['fc_b']


if __name__ == "__main__":
    key = jax.random.PRNGKey(0)
    k_x, k_p = jax.random.split(key)
    x = jax.random.normal(k_x, (BATCH, SEQ_LEN, EMBED_DIM), dtype=jnp.float32)
    params = init_params(k_p)

    # weight packing / casting happens exactly once, outside the forward path
    w_all, small = pack_params(params)

    forward = jax.jit(cnn_classifier_forward)
    out = forward(x, w_all, small)
    jax.block_until_ready(out)
    assert out.shape == (BATCH, NUM_CLASSES)

    # tight check against a reference using the same bf16 MXU-operand precision
    expected_bf16 = ref_forward(x, params, mxu_dtype=jnp.bfloat16)
    assert jnp.allclose(out, expected_bf16, atol=5e-3, rtol=5e-3), \
        "mismatch vs bf16-matched reference"

    # loose sanity check against exact f32 module semantics (bf16 MXU rounding only)
    expected_f32 = ref_forward(x, params, mxu_dtype=jnp.float32)
    assert jnp.allclose(out, expected_f32, atol=1e-1, rtol=1e-1), \
        "mismatch vs f32 reference"

    print("KERNEL_OK")
</pallas_src>

<mosaic_0001>
module attributes {stable_mosaic.version = 11 : i64} {
  func.func @cnn_classifier_kernel(%arg0: memref<32x32xf32, #tpu.memory_space<vmem>>, %arg1: memref<32x192xbf16, #tpu.memory_space<vmem>>, %arg2: memref<56x48xf32, #tpu.memory_space<vmem>>, %arg3: memref<2x8xf32, #tpu.memory_space<vmem>>) attributes {dimension_semantics = [], scalar_prefetch = 0 : i64, scratch_operands = 0 : i64, tpu.core_type = #tpu.core_type<tc>} {
    %c0 = arith.constant 0 : index
    %c0_0 = arith.constant 0 : index
    %0 = vector.load %arg0[%c0, %c0_0] : memref<32x32xf32, #tpu.memory_space<vmem>>, vector<32x32xf32>
    %1 = arith.truncf %0 : vector<32x32xf32> to vector<32x32xbf16>
    %c0_1 = arith.constant 0 : index
    %c0_2 = arith.constant 0 : index
    %2 = vector.load %arg1[%c0_1, %c0_2] : memref<32x192xbf16, #tpu.memory_space<vmem>>, vector<32x192xbf16>
    %cst = arith.constant dense<0.000000e+00> : vector<32x192xf32>
    %3 = tpu.matmul %1, %2, %cst {dimension_numbers = #tpu.dot_dimension_numbers<[1], [0], [0], [1], [0, 0, 1, 1], [], []>} : vector<32x32xbf16>, vector<32x192xbf16>, vector<32x192xf32> -> vector<32x192xf32>
    %4 = vector.shape_cast %3 : vector<32x192xf32> to vector<2x16x192xf32>
    %c0_3 = arith.constant 0 : index
    %c0_4 = arith.constant 0 : index
    %5 = vector.load %arg2[%c0_3, %c0_4] : memref<56x48xf32, #tpu.memory_space<vmem>>, vector<1x48xf32>
    %c1 = arith.constant 1 : index
    %c0_5 = arith.constant 0 : index
    %6 = vector.load %arg2[%c1, %c0_5] : memref<56x48xf32, #tpu.memory_space<vmem>>, vector<1x8xf32>
    %c8 = arith.constant 8 : index
    %c0_6 = arith.constant 0 : index
    %7 = vector.load %arg2[%c8, %c0_6] : memref<56x48xf32, #tpu.memory_space<vmem>>, vector<48x8xf32>
    %8 = vector.extract_strided_slice %4 {offsets = [0, 0, 0], sizes = [2, 14, 16], strides = [1, 1, 1]} : vector<2x16x192xf32> to vector<2x14x16xf32>
    %9 = vector.extract_strided_slice %4 {offsets = [0, 1, 16], sizes = [2, 14, 16], strides = [1, 1, 1]} : vector<2x16x192xf32> to vector<2x14x16xf32>
    %10 = arith.addf %8, %9 : vector<2x14x16xf32>
    %11 = vector.extract_strided_slice %4 {offsets = [0, 2, 32], sizes = [2, 14, 16], strides = [1, 1, 1]} : vector<2x16x192xf32> to vector<2x14x16xf32>
    %12 = arith.addf %10, %11 : vector<2x14x16xf32>
    %cst_7 = arith.constant dense<0xFF800000> : vector<2x16xf32>
    %13 = vector.multi_reduction <maximumf>, %12, %cst_7 [1] : vector<2x14x16xf32> to vector<2x16xf32>
    %14 = vector.extract_strided_slice %4 {offsets = [0, 0, 48], sizes = [2, 13, 16], strides = [1, 1, 1]} : vector<2x16x192xf32> to vector<2x13x16xf32>
    %15 = vector.extract_strided_slice %4 {offsets = [0, 1, 64], sizes = [2, 13, 16], strides = [1, 1, 1]} : vector<2x16x192xf32> to vector<2x13x16xf32>
    %16 = arith.addf %14, %15 : vector<2x13x16xf32>
    %17 = vector.extract_strided_slice %4 {offsets = [0, 2, 80], sizes = [2, 13, 16], strides = [1, 1, 1]} : vector<2x16x192xf32> to vector<2x13x16xf32>
    %18 = arith.addf %16, %17 : vector<2x13x16xf32>
    %19 = vector.extract_strided_slice %4 {offsets = [0, 3, 96], sizes = [2, 13, 16], strides = [1, 1, 1]} : vector<2x16x192xf32> to vector<2x13x16xf32>
    %20 = arith.addf %18, %19 : vector<2x13x16xf32>
    %cst_8 = arith.constant dense<0xFF800000> : vector<2x16xf32>
    %21 = vector.multi_reduction <maximumf>, %20, %cst_8 [1] : vector<2x13x16xf32> to vector<2x16xf32>
    %22 = vector.extract_strided_slice %4 {offsets = [0, 0, 112], sizes = [2, 12, 16], strides = [1, 1, 1]} : vector<2x16x192xf32> to vector<2x12x16xf32>
    %23 = vector.extract_strided_slice %4 {offsets = [0, 1, 128], sizes = [2, 12, 16], strides = [1, 1, 1]} : vector<2x16x192xf32> to vector<2x12x16xf32>
    %24 = arith.addf %22, %23 : vector<2x12x16xf32>
    %25 = vector.extract_strided_slice %4 {offsets = [0, 2, 144], sizes = [2, 12, 16], strides = [1, 1, 1]} : vector<2x16x192xf32> to vector<2x12x16xf32>
    %26 = arith.addf %24, %25 : vector<2x12x16xf32>
    %27 = vector.extract_strided_slice %4 {offsets = [0, 3, 160], sizes = [2, 12, 16], strides = [1, 1, 1]} : vector<2x16x192xf32> to vector<2x12x16xf32>
    %28 = arith.addf %26, %27 : vector<2x12x16xf32>
    %29 = vector.extract_strided_slice %4 {offsets = [0, 4, 176], sizes = [2, 12, 16], strides = [1, 1, 1]} : vector<2x16x192xf32> to vector<2x12x16xf32>
    %30 = arith.addf %28, %29 : vector<2x12x16xf32>
    %cst_9 = arith.constant dense<0xFF800000> : vector<2x16xf32>
    %31 = vector.multi_reduction <maximumf>, %30, %cst_9 [1] : vector<2x12x16xf32> to vector<2x16xf32>
    %32 = tpu.concatenate %13, %21, %31 in 1 : vector<2x16xf32>, vector<2x16xf32>, vector<2x16xf32> -> vector<2x48xf32>
    %33 = vector.broadcast %5 : vector<1x48xf32> to vector<2x48xf32>
    %34 = arith.addf %32, %33 : vector<2x48xf32>
    %cst_10 = arith.constant 0.000000e+00 : f32
    %35 = vector.broadcast %cst_10 : f32 to vector<2x48xf32>
    %36 = arith.maximumf %34, %35 : vector<2x48xf32>
    %37 = arith.truncf %36 : vector<2x48xf32> to vector<2x48xbf16>
    %38 = arith.truncf %7 : vector<48x8xf32> to vector<48x8xbf16>
    %cst_11 = arith.constant dense<0.000000e+00> : vector<2x8xf32>
    %39 = tpu.matmul %37, %38, %cst_11 {dimension_numbers = #tpu.dot_dimension_numbers<[1], [0], [0], [1], [0, 0, 1, 1], [], []>} : vector<2x48xbf16>, vector<48x8xbf16>, vector<2x8xf32> -> vector<2x8xf32>
    %40 = vector.broadcast %6 : vector<1x8xf32> to vector<2x8xf32>
    %41 = arith.addf %39, %40 : vector<2x8xf32>
    %c0_12 = arith.constant 0 : index
    %c0_13 = arith.constant 0 : index
    %42 = vector.load %arg3[%c0_12, %c0_13] : memref<2x8xf32, #tpu.memory_space<vmem>>, vector<2x8xf32>
    tpu.vector_store %arg3[%c0_12, %c0_13], %41 {strides = array<i32>} : memref<2x8xf32, #tpu.memory_space<vmem>>, vector<2x8xf32>,
    return
  }
}

</mosaic_0001>

<llo_original>
// kernel: cnn_classifier_forward.1
$region0: #{cnn_classifier_forward.1}
  #allocation0 [shape = 'u32[]', space=smem, size = 0x4, offset = 0x4, fixed_abs, tag = 'smem constant byte address 0x4 - core index']
  #allocation1 [shape = 'u32[144,128]{1,0:T(1,128)}', space=vmem, size = 0x12000, scoped, tag = 'internal scratch']
  %s0 = inlined_call_operand.vmem [shape: f32[32,32], index: 0, kind: input, shape index: {}]
  %s1 = inlined_call_operand.vmem [shape: bf16[32,192], index: 1, kind: input, shape index: {}]
  %s2 = inlined_call_operand.vmem [shape: f32[56,48], index: 2, kind: input, shape index: {}]
  %s3 = inlined_call_operand.hbm [shape: f32[2,8], index: 3, kind: output, shape index: {}]
  %s4 = sld [smem:[#allocation0]]
  $region22: #{cnn_classifier_forward.1} parent=0
    _
  %s6 = ssub.s32 1, %s4
  %s7 = scalar_select 0, %s6, %s4
  $region1: #{cnn_classifier_forward.1} parent=0
    #allocation2 [shape = 'u8[1024]{0}', space=vmem, size = 0x400, scoped, tag = 'output window, operand 0, single buffered']
    #allocation3 [shape = 's32[1]{0}', space=sflag, size = 0x4, scoped, tag = 'scoped memory for cnn_classifier_forward.1']
    %8 = vsyncpa [#allocation3], 0
    // Predicated region
    $region2: #{cnn_classifier_forward.1} parent=1 // pred_check
      _
    $region3: #{cnn_classifier_forward.1} parent=1 // pred_check_branch
      %10 = sbr.rel (0) target = $region5
    $region4: #{cnn_classifier_forward.1} parent=1 // pred_region
      _
    $region5: #{cnn_classifier_forward.1} parent=1 // pred_fallthru
      _
    // Predicated region
    $region6: #{cnn_classifier_forward.1} parent=1 // pred_check
      _
    $region7: #{cnn_classifier_forward.1} parent=1 // pred_check_branch
      %12 = sbr.rel (0) target = $region9
    $region8: #{cnn_classifier_forward.1} parent=1 // pred_region
      _
    $region9: #{cnn_classifier_forward.1} parent=1 // pred_fallthru
      _
    // Predicated region
    $region10: #{cnn_classifier_forward.1} parent=1 // pred_check
      _
    $region11: #{cnn_classifier_forward.1} parent=1 // pred_check_branch
      %14 = sbr.rel (0) target = $region13
    $region12: #{cnn_classifier_forward.1} parent=1 // pred_region
      _
    $region13: #{cnn_classifier_forward.1} parent=1 // pred_fallthru
      _
    %v16 = vld [vmem:[%s0] sm:$0xff]
    %v17 = vld [vmem:[%s0 + $0x8] sm:$0xff]
    %v18 = vld [vmem:[%s0 + $0x10] sm:$0xff]
    %v19 = vld [vmem:[%s0 + $0x18] sm:$0xff]
    %v20 = vpack.c.bf16 %v17, %v16
    %v21 = vpack.c.bf16 %v19, %v18
    %v22 = vld [vmem:[%s1] sm:$0xff]
    %v23 = vld [vmem:[%s1 + $0x8] sm:$0xff]
    %v24 = vld [vmem:[%s1 + $0x10] sm:$0xff]
    %v25 = vld [vmem:[%s1 + $0x18] sm:$0xff]
    %v30 = vunpack.c.l.b16 %v22
    %v31 = vunpack.c.h.b16 %v22
    %v32 = vunpack.c.l.b16 %v23
    %v33 = vunpack.c.h.b16 %v23
    %v34 = vunpack.c.l.b16 %v24
    %v35 = vunpack.c.h.b16 %v24
    %v36 = vunpack.c.l.b16 %v25
    %v37 = vunpack.c.h.b16 %v25
    %v38 = vpack.c.b16 %v32, %v30
    %v39 = vpack.c.b16 %v33, %v31
    %v40 = vpack.c.b16 %v36, %v34
    %v41 = vpack.c.b16 %v37, %v35
    %vm46 = vcmask 261120
    %v48 = vsel %vm46, %v20, 0
    %v51 = vsel %vm46, %v21, 0
    %53 = vmatprep.subr.bf16.mxu0 %v39
    %54 = vmatpush1.bf16.msra.mxu0 %v38
    %55 = vmatprep.subr.bf16.mxu0 %v41
    %56 = vmatpush1.bf16.msra.mxu0 %v40
    %57 = vmatprep.subr.bf16.mxu0 0
    %58 = vmatpush1.bf16.msra.mxu0 0
    %59 = vmatprep.subr.bf16.mxu0 0
    %60 = vmatpush1.bf16.msra.mxu0 0
    %61 = vmatprep.subr.bf16.mxu0 0
    %62 = vmatpush1.bf16.msra.mxu0 0
    %63 = vmatprep.subr.bf16.mxu0 0
    %64 = vmatpush1.bf16.msra.mxu0 0
    %65 = vmatprep.subr.bf16.mxu0 0
    %66 = vmatpush1.bf16.msra.mxu0 0
    %67 = vmatprep.subr.bf16.mxu0 0
    %68 = vmatpush1.bf16.msra.mxu0 0
    %69 = vmatprep.subr.bf16.mxu0 0
    %70 = vmatpush1.bf16.msra.mxu0 0
    %71 = vmatprep.subr.bf16.mxu0 0
    %72 = vmatpush1.bf16.msra.mxu0 0
    %73 = vmatprep.subr.bf16.mxu0 0
    %74 = vmatpush1.bf16.msra.mxu0 0
    %75 = vmatprep.subr.bf16.mxu0 0
    %76 = vmatpush1.bf16.msra.mxu0 0
    %77 = vmatprep.subr.bf16.mxu0 0
    %78 = vmatpush1.bf16.msra.mxu0 0
    %79 = vmatprep.subr.bf16.mxu0 0
    %80 = vmatpush1.bf16.msra.mxu0 0
    %81 = vmatprep.subr.bf16.mxu0 0
    %82 = vmatpush1.bf16.msra.mxu0 0
    %83 = vmatprep.subr.bf16.mxu0 0
    %84 = vmatpush1.bf16.msra.mxu0 0
    %85 = vmatprep.mubr.bf16.mxu0 0
    %86 = vmatmul.mubr.bf16.gmra.mrb[0].mxu0 %v48
    %v87 = vpop.f32.mrb[0].mxu0
    %v88 = vadd.f32 0.0, %v87
    %v89 = vpop.f32.mrb[0].mxu0
    %v90 = vadd.f32 0.0, %v89
    %v91 = vpop.f32.mrb[0].mxu0
    %v92 = vadd.f32 0.0, %v91
    %v93 = vpop.f32.mrb[0].mxu0
    %v94 = vadd.f32 0.0, %v93
    %95 = vmatprep.mubr.bf16.mxu0 0
    %96 = vmatmul.mubr.bf16.gmra.mrb[0].mxu0 %v51
    %v97 = vpop.f32.mrb[0].mxu0
    %v98 = vadd.f32 0.0, %v97
    %v99 = vpop.f32.mrb[0].mxu0
    %v100 = vadd.f32 0.0, %v99
    %v101 = vpop.f32.mrb[0].mxu0
    %v102 = vadd.f32 0.0, %v101
    %v103 = vpop.f32.mrb[0].mxu0
    %v104 = vadd.f32 0.0, %v103
    %105 = vdwg.mxu0
    %v106 = vld [vmem:[%s2] sm:$0x1]
    %v107 = vld [vmem:[%s2 + $0x1] sm:$0x1]
    %v108 = vld [vmem:[%s2 + $0x8] sm:$0xff]
    %v109 = vld [vmem:[%s2 + $0x10] sm:$0xff]
    %v110 = vld [vmem:[%s2 + $0x18] sm:$0xff]
    %v111 = vld [vmem:[%s2 + $0x20] sm:$0xff]
    %v112 = vld [vmem:[%s2 + $0x28] sm:$0xff]
    %v113 = vld [vmem:[%s2 + $0x30] sm:$0xff]
    %vm118 = vcmask 1046528
    %v119 = vrot.slane %v88, 1
    %v120 = vrot.slane %v92, 1
    %v121 = vsel %vm118, %v119, %v120
    %v122 = vrot.slane %v98, 1
    %v123 = vrot.slane %v102, 1
    %v124 = vsel %vm118, %v122, %v123
    %125 = vrot.lane.b32.xlu0 %v121, 112
    %v126 = vpop.permute.xlu0 %125
    %127 = vrot.lane.b32.xlu0 %v120, 112
    %v128 = vpop.permute.xlu0 %127
    %129 = vrot.lane.b32.xlu0 %v124, 112
    %v130 = vpop.permute.xlu0 %129
    %131 = vrot.lane.b32.xlu0 %v123, 112
    %v132 = vpop.permute.xlu0 %131
    %v137 = vadd.f32 %v88, %v126
    %v138 = vadd.f32 %v92, %v128
    %v139 = vadd.f32 %v98, %v130
    %v140 = vadd.f32 %v102, %v132
    %vm141 = vcmask 1045504
    %v142 = vrot.slane %v88, 2
    %v143 = vrot.slane %v92, 2
    %v144 = vsel %vm141, %v142, %v143
    %v145 = vrot.slane %v98, 2
    %v146 = vrot.slane %v102, 2
    %v147 = vsel %vm141, %v145, %v146
    %148 = vrot.lane.b32.xlu0 %v144, 96
    %v149 = vpop.permute.xlu0 %148
    %150 = vrot.lane.b32.xlu0 %v143, 96
    %v151 = vpop.permute.xlu0 %150
    %152 = vrot.lane.b32.xlu0 %v147, 96
    %v153 = vpop.permute.xlu0 %152
    %154 = vrot.lane.b32.xlu0 %v146, 96
    %v155 = vpop.permute.xlu0 %154
    %v160 = vadd.f32 %v137, %v149
    %v161 = vadd.f32 %v138, %v151
    %v162 = vadd.f32 %v139, %v153
    %v163 = vadd.f32 %v140, %v155
    %vm164 = vcmask 130048
    %v165 = vsel %vm164, %v160, -inf
    %vm166 = vcmask 128000
    %v167 = vsel %vm166, %v161, -inf
    %v168 = vmax.f32 %v165, %v167
    %v169 = vrot.slane %v168, 4
    %v170 = vmax.f32 %v168, %v169
    %v171 = vrot.slane %v170, 2
    %v172 = vmax.f32 %v170, %v171
    %v173 = vrot.slane %v172, 1
    %v174 = vmax.f32 %v172, %v173
    %v175 = vsel %vm164, %v162, -inf
    %v176 = vsel %vm166, %v163, -inf
    %v177 = vmax.f32 %v175, %v176
    %v178 = vrot.slane %v177, 4
    %v179 = vmax.f32 %v177, %v178
    %v180 = vrot.slane %v179, 2
    %v181 = vmax.f32 %v179, %v180
    %v182 = vrot.slane %v181, 1
    %v183 = vmax.f32 %v181, %v182
    %vm184 = vcmask 1044480
    %v185 = vrot.slane %v88, 3
    %v186 = vrot.slane %v92, 3
    %v187 = vsel %vm184, %v185, %v186
    %v188 = vrot.slane %v98, 3
    %v189 = vrot.slane %v102, 3
    %v190 = vsel %vm184, %v188, %v189
    %191 = vrot.lane.b32.xlu0 %v187, 80
    %v192 = vpop.permute.xlu0 %191
    %193 = vrot.lane.b32.xlu0 %v186, 80
    %v194 = vpop.permute.xlu0 %193
    %195 = vrot.lane.b32.xlu0 %v190, 80
    %v196 = vpop.permute.xlu0 %195
    %197 = vrot.lane.b32.xlu0 %v189, 80
    %v198 = vpop.permute.xlu0 %197
    %v203 = vadd.f32 %v160, %v192
    %v204 = vadd.f32 %v161, %v194
    %v205 = vadd.f32 %v162, %v196
    %v206 = vadd.f32 %v163, %v198
    %vm207 = vcmask 523648
    %v208 = vsel %vm207, %v203, -inf
    %vm209 = vcmask 520576
    %v210 = vsel %vm209, %v204, -inf
    %v211 = vmax.f32 %v208, %v210
    %v212 = vrot.slane %v211, 4
    %v213 = vmax.f32 %v211, %v212
    %v214 = vrot.slane %v213, 2
    %v215 = vmax.f32 %v213, %v214
    %v216 = vrot.slane %v215, 1
    %v217 = vmax.f32 %v215, %v216
    %v218 = vsel %vm207, %v205, -inf
    %v219 = vsel %vm209, %v206, -inf
    %v220 = vmax.f32 %v218, %v219
    %v221 = vrot.slane %v220, 4
    %v222 = vmax.f32 %v220, %v221
    %v223 = vrot.slane %v222, 2
    %v224 = vmax.f32 %v222, %v223
    %v225 = vrot.slane %v224, 1
    %v226 = vmax.f32 %v224, %v225
    %v231 = vrot.slane %v90, 1
    %v232 = vrot.slane %v94, 1
    %v233 = vsel %vm118, %v231, %v232
    %v234 = vrot.slane %v100, 1
    %v235 = vrot.slane %v104, 1
    %v236 = vsel %vm118, %v234, %v235
    %237 = vrot.lane.b32.xlu0 %v233, 112
    %v238 = vpop.permute.xlu0 %237
    %239 = vrot.lane.b32.xlu0 %v232, 112
    %v240 = vpop.permute.xlu0 %239
    %241 = vrot.lane.b32.xlu0 %v236, 112
    %v242 = vpop.permute.xlu0 %241
    %243 = vrot.lane.b32.xlu0 %v235, 112
    %v244 = vpop.permute.xlu0 %243
    %v249 = vadd.f32 %v88, %v238
    %v250 = vadd.f32 %v92, %v240
    %v251 = vadd.f32 %v98, %v242
    %v252 = vadd.f32 %v102, %v244
    %v253 = vrot.slane %v90, 2
    %v254 = vrot.slane %v94, 2
    %v255 = vsel %vm141, %v253, %v254
    %v256 = vrot.slane %v100, 2
    %v257 = vrot.slane %v104, 2
    %v258 = vsel %vm141, %v256, %v257
    %259 = vrot.lane.b32.xlu0 %v255, 96
    %v260 = vpop.permute.xlu0 %259
    %261 = vrot.lane.b32.xlu0 %v254, 96
    %v262 = vpop.permute.xlu0 %261
    %263 = vrot.lane.b32.xlu0 %v258, 96
    %v264 = vpop.permute.xlu0 %263
    %265 = vrot.lane.b32.xlu0 %v257, 96
    %v266 = vpop.permute.xlu0 %265
    %v271 = vadd.f32 %v249, %v260
    %v272 = vadd.f32 %v250, %v262
    %v273 = vadd.f32 %v251, %v264
    %v274 = vadd.f32 %v252, %v266
    %v275 = vrot.slane %v90, 3
    %v276 = vrot.slane %v94, 3
    %v277 = vsel %vm184, %v275, %v276
    %v278 = vrot.slane %v100, 3
    %v279 = vrot.slane %v104, 3
    %v280 = vsel %vm184, %v278, %v279
    %281 = vrot.lane.b32.xlu0 %v277, 80
    %v282 = vpop.permute.xlu0 %281
    %283 = vrot.lane.b32.xlu0 %v276, 80
    %v284 = vpop.permute.xlu0 %283
    %285 = vrot.lane.b32.xlu0 %v280, 80
    %v286 = vpop.permute.xlu0 %285
    %287 = vrot.lane.b32.xlu0 %v279, 80
    %v288 = vpop.permute.xlu0 %287
    %v293 = vadd.f32 %v271, %v282
    %v294 = vadd.f32 %v272, %v284
    %v295 = vadd.f32 %v273, %v286
    %v296 = vadd.f32 %v274, %v288
    %vm297 = vcmask 1043456
    %v298 = vrot.slane %v90, 4
    %v299 = vrot.slane %v94, 4
    %v300 = vsel %vm297, %v298, %v299
    %v301 = vrot.slane %v100, 4
    %v302 = vrot.slane %v104, 4
    %v303 = vsel %vm297, %v301, %v302
    %304 = vrot.lane.b32.xlu0 %v300, 64
    %v305 = vpop.permute.xlu0 %304
    %306 = vrot.lane.b32.xlu0 %v299, 64
    %v307 = vpop.permute.xlu0 %306
    %308 = vrot.lane.b32.xlu0 %v303, 64
    %v309 = vpop.permute.xlu0 %308
    %310 = vrot.lane.b32.xlu0 %v302, 64
    %v311 = vpop.permute.xlu0 %310
    %v316 = vadd.f32 %v293, %v305
    %v317 = vadd.f32 %v294, %v307
    %v318 = vadd.f32 %v295, %v309
    %v319 = vadd.f32 %v296, %v311
    %vm320 = vcmask 1048448
    %v321 = vsel %vm320, %v316, -inf
    %vm322 = vcmask 1044352
    %v323 = vsel %vm322, %v317, -inf
    %v324 = vmax.f32 %v321, %v323
    %v325 = vrot.slane %v324, 4
    %v326 = vmax.f32 %v324, %v325
    %v327 = vrot.slane %v326, 2
    %v328 = vmax.f32 %v326, %v327
    %v329 = vrot.slane %v328, 1
    %v330 = vmax.f32 %v328, %v329
    %v331 = vsel %vm320, %v318, -inf
    %v332 = vsel %vm322, %v319, -inf
    %v333 = vmax.f32 %v331, %v332
    %v334 = vrot.slane %v333, 4
    %v335 = vmax.f32 %v333, %v334
    %v336 = vrot.slane %v335, 2
    %v337 = vmax.f32 %v335, %v336
    %v338 = vrot.slane %v337, 1
    %v339 = vmax.f32 %v337, %v338
    %vm342 = vcmask 1041409
    %v343 = vsel %vm342, %v183, %v174
    %v347 = vsel %vm342, %v226, %v217
    %348 = vrot.lane.b32.xlu0 %v347, 96
    %v349 = vpop.permute.xlu0 %348
    %v353 = vsel %vm342, %v339, %v330
    %354 = vrot.lane.b32.xlu0 %v353, 48
    %v355 = vpop.permute.xlu0 %354
    %v357 = vsel %vm164, %v343, %v349
    %v358 = vsel %vm46, %v357, %v355
    %v359 = vlaneseq
    %v360 = vshrl.u32 %v359, 7
    %v361 = vsub.s32 0, %v360
    %v362 = vrot.slane %v106, %v361
    %v363 = vadd.f32 %v358, %v362
    %v364 = vmax.f32 %v363, 0.0
    %v365 = vpack.c.bf16 %v364, %v364
    %v366 = vpack.c.bf16 %v109, %v108
    %v367 = vpack.c.bf16 %v111, %v110
    %v368 = vpack.c.bf16 %v113, %v112
    %v369 = vlaneseq
    %v370 = vshrl.u32 %v369, 7
    %v371 = vsub.s32 0, %v370
    %v372 = vrot.slane %v107, %v371
    %vm373 = vcmask 392192
    %v375 = vsel %vm373, %v365, 0
    %377 = vmatprep.subr.bf16.mxu0 0
    %378 = vmatpush1.bf16.msra.mxu0 %v366
    %379 = vmatprep.subr.bf16.mxu0 0
    %380 = vmatpush1.bf16.msra.mxu0 %v367
    %381 = vmatprep.subr.bf16.mxu0 0
    %382 = vmatpush1.bf16.msra.mxu0 %v368
    %383 = vmatprep.subr.bf16.mxu0 0
    %384 = vmatpush1.bf16.msra.mxu0 0
    %385 = vmatprep.subr.bf16.mxu0 0
    %386 = vmatpush1.bf16.msra.mxu0 0
    %387 = vmatprep.subr.bf16.mxu0 0
    %388 = vmatpush1.bf16.msra.mxu0 0
    %389 = vmatprep.subr.bf16.mxu0 0
    %390 = vmatpush1.bf16.msra.mxu0 0
    %391 = vmatprep.subr.bf16.mxu0 0
    %392 = vmatpush1.bf16.msra.mxu0 0
    %393 = vmatprep.subr.bf16.mxu0 0
    %394 = vmatpush1.bf16.msra.mxu0 0
    %395 = vmatprep.subr.bf16.mxu0 0
    %396 = vmatpush1.bf16.msra.mxu0 0
    %397 = vmatprep.subr.bf16.mxu0 0
    %398 = vmatpush1.bf16.msra.mxu0 0
    %399 = vmatprep.subr.bf16.mxu0 0
    %400 = vmatpush1.bf16.msra.mxu0 0
    %401 = vmatprep.subr.bf16.mxu0 0
    %402 = vmatpush1.bf16.msra.mxu0 0
    %403 = vmatprep.subr.bf16.mxu0 0
    %404 = vmatpush1.bf16.msra.mxu0 0
    %405 = vmatprep.subr.bf16.mxu0 0
    %406 = vmatpush1.bf16.msra.mxu0 0
    %407 = vmatprep.subr.bf16.mxu0 0
    %408 = vmatpush1.bf16.msra.mxu0 0
    %409 = vmatprep.mubr.bf16.mxu0 0
    %410 = vmatmul.mubr.bf16.gmra.mrb[0].mxu0 %v375
    %v411 = vpop.f32.mrb[0].mxu0
    %v412 = vadd.f32 %v372, %v411
    %v413 = vpop.f32.mrb[0].mxu0
    %v414 = vpop.f32.mrb[0].mxu0
    %v415 = vpop.f32.mrb[0].mxu0
    %416 = vdwg.mxu0
    %vm417 = vcmask 58368
    %418 = vst.msk [vmem:[#allocation2] sm:$0x3] %vm417, %v412
    // Predicated region
    $region14: #{cnn_classifier_forward.1} parent=1 // pred_check
      _
    $region15: #{cnn_classifier_forward.1} parent=1 // pred_check_branch
      %420 = sbr.rel (0) target = $region17
    $region16: #{cnn_classifier_forward.1} parent=1 // pred_region
      %s422 = ssub.s32 32, 32
      %423 = vsyncadd [#allocation3], %s422
      %s425 = sshll.u32 [#allocation2], 4
      %s426 = int_to_ptr.vmem [resolvable:$true] %s425
      %428 = dma.vmem_to_hbm [thread:$0]  %s426, 32, %s3, [#allocation3]
    $region17: #{cnn_classifier_forward.1} parent=1 // pred_fallthru
      _
    // Predicated region
    $region18: #{cnn_classifier_forward.1} parent=1 // pred_check
      _
    $region19: #{cnn_classifier_forward.1} parent=1 // pred_check_branch
      %430 = sbr.rel (0) target = $region21
    $region20: #{cnn_classifier_forward.1} parent=1 // pred_region
      %431 = dma.done [#allocation3], 32
    $region21: #{cnn_classifier_forward.1} parent=1 // pred_fallthru
      _
    %432 = vsyncpa [#allocation3], 1

</llo_original>
